<compile_context>
chip_gen: v6e
topology: v6e:2x2x1
jax: 0.10.0
libtpu: 0.0.40
codegen_flags: <defaults>
</compile_context>

<pallas_src>
import functools

import jax
import jax.numpy as jnp
from jax import lax
from jax.experimental import pallas as pl
from jax.experimental.pallas import tpu as pltpu

EPS = 1e-8


def _round_up(x, m):
    return ((x + m - 1) // m) * m


def _fast_pow(x, g):
    """Integer-gamma power without exp/log; returns None to mean 'exactly 1'."""
    g = float(g)
    if g == 0.0:
        return None
    if g == 1.0:
        return x
    if g == 2.0:
        return x * x
    return jnp.power(jnp.maximum(x, EPS), g)


def _aal_kernel(*refs, gamma_pos, gamma_neg, k, clip, has_mask, has_weight,
                want_elem, hard_targets, tile_rows, ragged, rows_in_last):
    it = iter(refs)
    pred_ref = next(it)
    tgt_ref = next(it)
    mask_ref = next(it) if has_mask else None
    w_ref = next(it) if has_weight else None
    out_ref = next(it)                       # elementwise loss OR (8,W) partial

    pred = pred_ref[...].astype(jnp.float32)
    tgt = tgt_ref[...].astype(jnp.float32)   # target.type_as(pred) equivalent
    anti = 1.0 - tgt

    xs_pos = jax.nn.sigmoid(pred)
    if clip >= 1e-3:
        # sigmoid(-x) == 1 - sigmoid(x); safe because the +clip floor dominates
        # the log argument.  Saves one EUP sigmoid per element.
        xs_neg = jnp.minimum((1.0 - xs_pos) + clip, 1.0)
    elif clip > 0:
        xs_neg = jnp.minimum(jax.nn.sigmoid(-pred) + clip, 1.0)
    else:
        xs_neg = jax.nn.sigmoid(-pred)

    loss = (-k * tgt * jnp.log(jnp.maximum(xs_pos, EPS))
            - (1.0 - k) * anti * jnp.log(jnp.maximum(xs_neg, EPS)))

    if gamma_pos > 0 or gamma_neg > 0:       # asymmetric focusing
        pos_target = xs_neg * tgt + xs_pos * anti
        if hard_targets:
            # Hard {0,1} targets + integer gammas: pow -> select/mul (EUP-free
            # for the default gamma_pos=0, gamma_neg=1 configuration).
            wp = _fast_pow(pos_target, gamma_pos)
            wn = _fast_pow(pos_target, gamma_neg)
            one_sided_w = jnp.where(tgt > 0.5,
                                    1.0 if wp is None else wp,
                                    1.0 if wn is None else wn)
        else:
            one_sided_gamma = gamma_pos * tgt + gamma_neg * anti
            # EPS clamp guards pow(0, 0) -> NaN when clip == 0.
            one_sided_w = jnp.power(jnp.maximum(pos_target, EPS),
                                    one_sided_gamma)
        loss = loss * one_sided_w

    if has_mask:
        loss = loss * mask_ref[...].astype(jnp.float32)
    if has_weight:
        loss = loss * w_ref[...].astype(jnp.float32)   # (tr,1) lane-broadcast

    if want_elem:
        # Ragged last block: out-of-bounds rows are simply not written back.
        out_ref[...] = loss.astype(out_ref.dtype)
        return

    # Sum/mean path: VPU-only partial reduction (add groups of 8 sublanes),
    # no in-kernel cross-lane reduce; the final jnp.sum happens in JAX.
    def _store_partial(v):
        out_ref[...] = jnp.sum(v.reshape(tile_rows // 8, 8, v.shape[-1]),
                               axis=0)

    if ragged:
        last = pl.program_id(0) == pl.num_programs(0) - 1

        @pl.when(last)
        def _():
            row = lax.broadcasted_iota(jnp.int32, loss.shape, 0)
            _store_partial(jnp.where(row < rows_in_last, loss, 0.0))

        @pl.when(jnp.logical_not(last))
        def _():
            _store_partial(loss)
    else:
        _store_partial(loss)


def _aal_pallas(pred, target, mask, weight_col, *, gamma_pos, gamma_neg, k,
                clip, want_elem, hard_targets, tile_rows_target, lane_target):
    n, c = pred.shape
    elems = n * c
    has_mask = mask is not None
    has_weight = weight_col is not None

    # ---- layout: free lane-dense slab when possible, else natural (N, C) ----
    use_slab = (not has_weight) and (elems % 128 == 0)
    if use_slab:
        lane = 128
        for cand in (1024, 512, 256):
            if cand <= lane_target and elems % cand == 0 and elems // cand >= 8:
                lane = cand
                break
        rows, width = elems // lane, lane
        pred_s = pred.reshape(rows, lane)              # free row-major reshape
        tgt_s = target.reshape(rows, lane)
        mask_s = mask.reshape(rows, lane) if has_mask else None
        w_s = None
    else:
        rows, width = n, c
        pred_s, tgt_s, mask_s, w_s = pred, target, mask, weight_col

    # ---- row tiling ----
    tr = min(_round_up(max(tile_rows_target, 8), 8), _round_up(rows, 8))
    if rows > 8:                            # keep >=2 grid steps for v7x's 2 TCs
        tr = min(tr, _round_up(-(-rows // 2), 8))
    tr = max(tr, 8)

    # VMEM clamp (conservative f32 accounting; safe on 64 MiB v7x physical).
    n_streams = 2 + int(has_mask) + int(has_weight) + int(want_elem)
    max_tile_bytes = (36 << 20) // (2 * n_streams)
    tr_cap = max(8, (max_tile_bytes // (width * 4)) // 8 * 8)
    tr = min(tr, tr_cap)
    # TODO(synk): column-tile the natural (N, C) path if C alone overflows VMEM.

    grid = -(-rows // tr)
    ragged = (rows % tr) != 0
    rows_in_last = rows - (grid - 1) * tr

    blk2d = pl.BlockSpec((tr, width), lambda i: (i, 0))
    operands = [pred_s, tgt_s]
    in_specs = [blk2d, blk2d]
    if has_mask:
        operands.append(mask_s)
        in_specs.append(blk2d)
    if has_weight:
        operands.append(w_s)
        in_specs.append(pl.BlockSpec((tr, 1), lambda i: (i, 0)))

    if want_elem:
        out_shape = jax.ShapeDtypeStruct((rows, width), pred.dtype)
        out_specs = pl.BlockSpec((tr, width), lambda i: (i, 0))
    else:
        out_shape = jax.ShapeDtypeStruct((8 * grid, width), jnp.float32)
        out_specs = pl.BlockSpec((8, width), lambda i: (i, 0))

    kernel = functools.partial(
        _aal_kernel, gamma_pos=gamma_pos, gamma_neg=gamma_neg, k=k, clip=clip,
        has_mask=has_mask, has_weight=has_weight, want_elem=want_elem,
        hard_targets=hard_targets, tile_rows=tr, ragged=ragged,
        rows_in_last=rows_in_last)

    tile_bytes = tr * width * 4
    vmem_limit = int(min(40 << 20,
                         max(16 << 20, 2 * n_streams * tile_bytes + (2 << 20))))

    out = pl.pallas_call(
        kernel,
        out_shape=out_shape,
        grid_spec=pltpu.PrefetchScalarGridSpec(
            num_scalar_prefetch=0,
            grid=(grid,),
            in_specs=in_specs,
            out_specs=out_specs,
        ),
        compiler_params=pltpu.CompilerParams(
            dimension_semantics=("parallel",),       # independent per-tile work
            vmem_limit_bytes=vmem_limit),
    )(*operands)

    if want_elem:
        return out.reshape(n, c) if use_slab else out   # free reshape (no pad)
    return jnp.sum(out)                                 # tiny final reduction


class AsymmetricAngularLossWithIgnore:
    """JAX/Pallas port of the PyTorch module (forward pass only)."""

    def __init__(self, gamma_pos=0.0, gamma_neg=1.0, k=0.8, clip=0.05,
                 reduction="mean", loss_weight=1.0, hard_targets=False,
                 tile_rows=4096, lane_width=512):
        self.gamma_pos = gamma_pos
        self.gamma_neg = gamma_neg
        self.k = k
        self.clip = clip
        self.reduction = reduction
        self.loss_weight = loss_weight
        self.hard_targets = hard_targets           # enables pow->select fast path
        self.tile_rows = max(8, (int(tile_rows) // 8) * 8)
        self.lane_width = max(128, (int(lane_width) // 128) * 128)

    def __call__(self, pred, target, valid_label_mask=None, weight=None,
                 avg_factor=None, reduction_override=None):
        if reduction_override not in (None, "none", "mean", "sum"):
            raise ValueError("reduction_override should be none/mean/sum/None")
        reduction = reduction_override if reduction_override else self.reduction
        if pred.shape != target.shape:
            raise ValueError("pred and target should be in the same shape.")
        if pred.ndim != 2:
            raise ValueError("expected 2D (N, C) inputs")
        n, c = pred.shape

        weight_col = None
        if weight is not None:
            if weight.ndim != 1:
                raise ValueError("weight must be 1-D (N,)")
            if weight.shape[0] != n:
                raise ValueError("weight must have length N")
            weight_col = weight.reshape(-1, 1)      # free view; cast in-kernel

        want_elem = reduction == "none"
        result = _aal_pallas(
            pred, target, valid_label_mask, weight_col,
            gamma_pos=self.gamma_pos, gamma_neg=self.gamma_neg,
            k=self.k, clip=self.clip, want_elem=want_elem,
            hard_targets=self.hard_targets,
            tile_rows_target=self.tile_rows, lane_target=self.lane_width)

        if reduction == "none":
            out = result
        elif reduction == "sum":
            out = result
        else:  # mean
            denom = avg_factor if avg_factor is not None else (n * c)
            out = result / denom
        return self.loss_weight * out


# ----------------------------- pure-JAX reference -----------------------------
def _reference(pred, target, valid_label_mask=None, weight=None, *,
               gamma_pos=0.0, gamma_neg=1.0, k=0.8, clip=0.05,
               reduction="mean", avg_factor=None, loss_weight=1.0):
    target = target.astype(pred.dtype)
    anti = 1.0 - target
    xs_pos = jax.nn.sigmoid(pred)
    xs_neg = jax.nn.sigmoid(-pred)
    if clip > 0:
        xs_neg = jnp.minimum(xs_neg + clip, 1.0)
    loss = (-k * target * jnp.log(jnp.maximum(xs_pos, EPS))
            - (1.0 - k) * anti * jnp.log(jnp.maximum(xs_neg, EPS)))
    if gamma_pos > 0 or gamma_neg > 0:
        pos_target = xs_neg * target + xs_pos * anti
        gamma = gamma_pos * target + gamma_neg * anti
        loss = loss * jnp.power(pos_target, gamma)
    if valid_label_mask is not None:
        loss = loss * valid_label_mask
    if weight is not None:
        loss = loss * weight.astype(jnp.float32).reshape(-1, 1)
    if reduction != "mean":
        avg_factor = None
    if reduction == "none":
        out = loss
    elif reduction == "sum":
        out = loss.sum()
    else:
        out = loss.sum() / avg_factor if avg_factor is not None else loss.mean()
    return loss_weight * out


if __name__ == "__main__":
    key = jax.random.PRNGKey(0)
    k1, k2, k3, k4, k5, k6 = jax.random.split(key, 6)

    # Case A: mean reduction, mask + weight, tiny class dim (natural 2D path).
    N, C = 16, 8
    pred = jax.random.normal(k1, (N, C), jnp.float32) * 2.0
    target = (jax.random.uniform(k2, (N, C)) > 0.5).astype(jnp.float32)
    mask = (jax.random.uniform(k3, (N, C)) > 0.1).astype(jnp.float32)
    weight = jax.random.uniform(k4, (N,), jnp.float32) + 0.5

    loss_fn = AsymmetricAngularLossWithIgnore()
    out_a = jax.block_until_ready(loss_fn(pred, target, mask, weight))
    ref_a = _reference(pred, target, mask, weight)
    assert jnp.allclose(out_a, ref_a, rtol=1e-5, atol=1e-6), (out_a, ref_a)

    # Case B: 'none' reduction, no mask/weight (lane-dense slab, free reshape).
    out_b = jax.block_until_ready(loss_fn(pred, target,
                                          reduction_override="none"))
    ref_b = _reference(pred, target, reduction="none")
    assert out_b.shape == (N, C)
    assert jnp.allclose(out_b, ref_b, rtol=1e-5, atol=1e-6)

    # Case B2: sum reduction with mask only (slab path with flattened mask).
    out_b2 = jax.block_until_ready(loss_fn(pred, target, mask,
                                           reduction_override="sum"))
    ref_b2 = _reference(pred, target, mask, reduction="sum")
    assert jnp.allclose(out_b2, ref_b2, rtol=1e-5, atol=1e-5), (out_b2, ref_b2)

    # Case C: ragged multi-tile natural path (N=40 not divisible by tile),
    # sum reduction, no mask/weight — exercises the pl.when tail mask.
    N2, C2 = 40, 30
    pred2 = jax.random.normal(k5, (N2, C2), jnp.float32) * 3.0
    target2 = (jax.random.uniform(k6, (N2, C2)) > 0.5).astype(jnp.float32)
    out_c = jax.block_until_ready(loss_fn(pred2, target2,
                                          reduction_override="sum"))
    ref_c = _reference(pred2, target2, reduction="sum")
    assert jnp.allclose(out_c, ref_c, rtol=1e-4, atol=1e-4), (out_c, ref_c)

    # Case D: multi-tile grid with mask + weight + avg_factor (mean).
    mask2 = (jax.random.uniform(k3, (N2, C2)) > 0.2).astype(jnp.float32)
    weight2 = jax.random.uniform(k4, (N2,), jnp.float32) + 0.5
    small_fn = AsymmetricAngularLossWithIgnore(tile_rows=8)
    out_d = jax.block_until_ready(
        small_fn(pred2, target2, mask2, weight2, avg_factor=123.0))
    ref_d = _reference(pred2, target2, mask2, weight2, avg_factor=123.0)
    assert jnp.allclose(out_d, ref_d, rtol=1e-5, atol=1e-6), (out_d, ref_d)

    # Case E: hard-target fast path (pow -> select) vs pow reference.
    fast_fn = AsymmetricAngularLossWithIgnore(hard_targets=True)
    out_e = jax.block_until_ready(fast_fn(pred2, target2))
    ref_e = _reference(pred2, target2)
    assert jnp.allclose(out_e, ref_e, rtol=1e-4, atol=1e-5), (out_e, ref_e)

    print("KERNEL_OK")
</pallas_src>

<mosaic_0001>
module attributes {stable_mosaic.version = 11 : i64} {
  func.func @_aal_kernel(%arg0: i32, %arg1: memref<8x8xf32, #tpu.memory_space<vmem>>, %arg2: memref<8x8xf32, #tpu.memory_space<vmem>>, %arg3: memref<8x8xf32, #tpu.memory_space<vmem>>, %arg4: memref<8x1xf32, #tpu.memory_space<vmem>>, %arg5: memref<8x8xf32, #tpu.memory_space<vmem>>) attributes {dimension_semantics = [#tpu.dimension_semantics<parallel>], iteration_bounds = array<i64: 2>, scalar_prefetch = 0 : i64, scratch_operands = 0 : i64, tpu.core_type = #tpu.core_type<tc>, window_params = [{transform_indices = @transform_0, window_bounds = array<i64: 8, 8>}, {transform_indices = @transform_1, window_bounds = array<i64: 8, 8>}, {transform_indices = @transform_2, window_bounds = array<i64: 8, 8>}, {transform_indices = @transform_3, window_bounds = array<i64: 8, 1>}, {transform_indices = @transform_4, window_bounds = array<i64: 8, 8>}]} {
    %c0 = arith.constant 0 : index
    %c0_0 = arith.constant 0 : index
    %0 = vector.load %arg1[%c0, %c0_0] : memref<8x8xf32, #tpu.memory_space<vmem>>, vector<8x8xf32>
    %c0_1 = arith.constant 0 : index
    %c0_2 = arith.constant 0 : index
    %1 = vector.load %arg2[%c0_1, %c0_2] : memref<8x8xf32, #tpu.memory_space<vmem>>, vector<8x8xf32>
    %cst = arith.constant 1.000000e+00 : f32
    %2 = vector.broadcast %cst : f32 to vector<8x8xf32>
    %3 = arith.subf %2, %1 : vector<8x8xf32>
    %4 = arith.negf %0 : vector<8x8xf32>
    %5 = math.exp %4 : vector<8x8xf32>
    %cst_3 = arith.constant 1.000000e+00 : f32
    %6 = vector.broadcast %cst_3 : f32 to vector<8x8xf32>
    %7 = arith.addf %6, %5 : vector<8x8xf32>
    %8 = arith.divf %6, %7 : vector<8x8xf32>
    %cst_4 = arith.constant 1.000000e+00 : f32
    %9 = vector.broadcast %cst_4 : f32 to vector<8x8xf32>
    %10 = arith.subf %9, %8 : vector<8x8xf32>
    %cst_5 = arith.constant 5.000000e-02 : f32
    %11 = vector.broadcast %cst_5 : f32 to vector<8x8xf32>
    %12 = arith.addf %10, %11 : vector<8x8xf32>
    %cst_6 = arith.constant 1.000000e+00 : f32
    %13 = vector.broadcast %cst_6 : f32 to vector<8x8xf32>
    %14 = arith.minimumf %12, %13 : vector<8x8xf32>
    %cst_7 = arith.constant -8.000000e-01 : f32
    %15 = vector.broadcast %cst_7 : f32 to vector<8x8xf32>
    %16 = arith.mulf %15, %1 : vector<8x8xf32>
    %cst_8 = arith.constant 9.99999993E-9 : f32
    %17 = vector.broadcast %cst_8 : f32 to vector<8x8xf32>
    %18 = arith.maximumf %8, %17 : vector<8x8xf32>
    %19 = math.log %18 : vector<8x8xf32>
    %20 = arith.mulf %16, %19 : vector<8x8xf32>
    %cst_9 = arith.constant 2.000000e-01 : f32
    %21 = vector.broadcast %cst_9 : f32 to vector<8x8xf32>
    %22 = arith.mulf %21, %3 : vector<8x8xf32>
    %cst_10 = arith.constant 9.99999993E-9 : f32
    %23 = vector.broadcast %cst_10 : f32 to vector<8x8xf32>
    %24 = arith.maximumf %14, %23 : vector<8x8xf32>
    %25 = math.log %24 : vector<8x8xf32>
    %26 = arith.mulf %22, %25 : vector<8x8xf32>
    %27 = arith.subf %20, %26 : vector<8x8xf32>
    %28 = arith.mulf %14, %1 : vector<8x8xf32>
    %29 = arith.mulf %8, %3 : vector<8x8xf32>
    %30 = arith.addf %28, %29 : vector<8x8xf32>
    %cst_11 = arith.constant 0.000000e+00 : f32
    %31 = vector.broadcast %cst_11 : f32 to vector<8x8xf32>
    %32 = arith.mulf %31, %1 : vector<8x8xf32>
    %cst_12 = arith.constant 1.000000e+00 : f32
    %33 = vector.broadcast %cst_12 : f32 to vector<8x8xf32>
    %34 = arith.mulf %33, %3 : vector<8x8xf32>
    %35 = arith.addf %32, %34 : vector<8x8xf32>
    %cst_13 = arith.constant 9.99999993E-9 : f32
    %36 = vector.broadcast %cst_13 : f32 to vector<8x8xf32>
    %37 = arith.maximumf %30, %36 : vector<8x8xf32>
    %38 = math.powf %37, %35 : vector<8x8xf32>
    %39 = arith.mulf %27, %38 : vector<8x8xf32>
    %c0_14 = arith.constant 0 : index
    %c0_15 = arith.constant 0 : index
    %40 = vector.load %arg3[%c0_14, %c0_15] : memref<8x8xf32, #tpu.memory_space<vmem>>, vector<8x8xf32>
    %41 = arith.mulf %39, %40 : vector<8x8xf32>
    %c0_16 = arith.constant 0 : index
    %c0_17 = arith.constant 0 : index
    %42 = vector.load %arg4[%c0_16, %c0_17] : memref<8x1xf32, #tpu.memory_space<vmem>>, vector<8x1xf32>
    %43 = vector.broadcast %42 : vector<8x1xf32> to vector<8x8xf32>
    %44 = arith.mulf %41, %43 : vector<8x8xf32>
    %45 = vector.shape_cast %44 : vector<8x8xf32> to vector<1x8x8xf32>
    %cst_18 = arith.constant dense<0.000000e+00> : vector<8x8xf32>
    %46 = vector.multi_reduction <add>, %45, %cst_18 [0] : vector<1x8x8xf32> to vector<8x8xf32>
    %c0_19 = arith.constant 0 : index
    %c0_20 = arith.constant 0 : index
    %47 = vector.load %arg5[%c0_19, %c0_20] : memref<8x8xf32, #tpu.memory_space<vmem>>, vector<8x8xf32>
    tpu.vector_store %arg5[%c0_19, %c0_20], %46 {strides = array<i32>} : memref<8x8xf32, #tpu.memory_space<vmem>>, vector<8x8xf32>,
    return
  }
  func.func @transform_0(%arg0: i32) -> (i32, i32) {
    %c0_i32 = arith.constant 0 : i32
    %c0_i32_0 = arith.constant 0 : i32
    return %arg0, %c0_i32 : i32, i32
  }
  func.func @transform_1(%arg0: i32) -> (i32, i32) {
    %c0_i32 = arith.constant 0 : i32
    %c0_i32_0 = arith.constant 0 : i32
    return %arg0, %c0_i32 : i32, i32
  }
  func.func @transform_2(%arg0: i32) -> (i32, i32) {
    %c0_i32 = arith.constant 0 : i32
    %c0_i32_0 = arith.constant 0 : i32
    return %arg0, %c0_i32 : i32, i32
  }
  func.func @transform_3(%arg0: i32) -> (i32, i32) {
    %c0_i32 = arith.constant 0 : i32
    %c0_i32_0 = arith.constant 0 : i32
    return %arg0, %c0_i32 : i32, i32
  }
  func.func @transform_4(%arg0: i32) -> (i32, i32) {
    %c0_i32 = arith.constant 0 : i32
    %c0_i32_0 = arith.constant 0 : i32
    return %arg0, %c0_i32 : i32, i32
  }
}

</mosaic_0001>

<llo_original>
// kernel: tpu_custom_call.1
$region0: #{tpu_custom_call.1}
  #allocation0 [shape = 'u32[]', space=smem, size = 0x4, offset = 0x4, fixed_abs, tag = 'smem constant byte address 0x4 - core index']
  #allocation1 [shape = 'u32[144,128]{1,0:T(1,128)}', space=vmem, size = 0x12000, scoped, tag = 'internal scratch']
  %s0 = inlined_call_operand.vmem [shape: f32[16,8], index: 0, kind: input, shape index: {}]
  %s1 = inlined_call_operand.vmem [shape: f32[16,8], index: 1, kind: input, shape index: {}]
  %s2 = inlined_call_operand.vmem [shape: f32[16,8], index: 2, kind: input, shape index: {}]
  %s3 = inlined_call_operand.vmem [shape: f32[16,1], index: 3, kind: input, shape index: {}]
  %s4 = inlined_call_operand.vmem [shape: f32[16,8], index: 4, kind: output, shape index: {}]
  %s5 = sld [smem:[#allocation0]]
  $region49: #{tpu_custom_call.1} parent=0
    _
  %s7 = ssub.s32 1, %s5
  %s8 = scalar_select 0, %s7, %s5
  loop: start=0, step=1, limit=4
  $region2: #{tpu_custom_call.1} parent=0 // loop_pre_header
    _
  $region3: #{tpu_custom_call.1} parent=0 // loop_header
    %s10 = sphi 0, %s14
    %p11 = scmp.ge.s32.totalorder %s10, 4
    %s20 = sphi 0, %s22
    %s23 = sphi 0, %s20
    %s24 = sphi 0, %s23
    %s40 = sphi 0, %s24
    %s46 = sphi 0, %s48
    %s49 = sphi 0, %s46
    %s50 = sphi 0, %s49
    %s66 = sphi 0, %s50
    %s72 = sphi 0, %s74
    %s75 = sphi 0, %s72
    %s76 = sphi 0, %s75
    %s92 = sphi 0, %s76
    %s98 = sphi 0, %s100
    %s101 = sphi 0, %s98
    %s102 = sphi 0, %s101
    %s118 = sphi 0, %s102
    %s124 = sphi 0, %s126
    %s127 = sphi 0, %s124
    %s128 = sphi 0, %s127
    %s144 = sphi 0, %s128
  $region4: #{tpu_custom_call.1} parent=0 // loop_header_branch
    %13 = sbr.rel (%p11) target = $region8
  $region5: #{tpu_custom_call.1} parent=0 // loop_body
    %s15 = ssub.s32 %s10, 1
    %s16 = ssub.s32 %s10, 2
    %s17 = sadd.s32 %s10, 1
    %s18 = ssub.s32 %s10, %s17
    %p19 = scmp.eq.s32.totalorder %s18, 0
    %s21 = sadd.s32 %s20, 1
    %s22 = scalar_select %p19, %s20, %s21
    %p25 = pneg %p19
    %p26 = scmp.eq.s32.totalorder %s10, 1
    %p27 = por %p25, %p26
    %p28 = scmp.ne.s32.totalorder %s20, %s23
    %p29 = scmp.eq.s32.totalorder %s10, 0
    %p30 = por %p28, %p29
    %p31 = scmp.ne.s32.totalorder %s20, %s23
    %p32 = scmp.eq.s32.totalorder %s15, 1
    %p33 = por %p31, %p32
    %p34 = scmp.ne.s32.totalorder %s23, %s24
    %p35 = scmp.eq.s32.totalorder %s15, 0
    %p36 = por %p34, %p35
    %p37 = scmp.ne.s32.totalorder %s23, %s24
    %p38 = scmp.eq.s32.totalorder %s16, 1
    %p39 = por %p37, %p38
    %p41 = scmp.ne.s32.totalorder %s24, %s40
    %p42 = scmp.eq.s32.totalorder %s16, 0
    %p43 = por %p41, %p42
    %s44 = ssub.s32 %s10, %s17
    %p45 = scmp.eq.s32.totalorder %s44, 0
    %s47 = sadd.s32 %s46, 1
    %s48 = scalar_select %p45, %s46, %s47
    %p51 = pneg %p45
    %p52 = scmp.eq.s32.totalorder %s10, 1
    %p53 = por %p51, %p52
    %p54 = scmp.ne.s32.totalorder %s46, %s49
    %p55 = scmp.eq.s32.totalorder %s10, 0
    %p56 = por %p54, %p55
    %p57 = scmp.ne.s32.totalorder %s46, %s49
    %p58 = scmp.eq.s32.totalorder %s15, 1
    %p59 = por %p57, %p58
    %p60 = scmp.ne.s32.totalorder %s49, %s50
    %p61 = scmp.eq.s32.totalorder %s15, 0
    %p62 = por %p60, %p61
    %p63 = scmp.ne.s32.totalorder %s49, %s50
    %p64 = scmp.eq.s32.totalorder %s16, 1
    %p65 = por %p63, %p64
    %p67 = scmp.ne.s32.totalorder %s50, %s66
    %p68 = scmp.eq.s32.totalorder %s16, 0
    %p69 = por %p67, %p68
    %s70 = ssub.s32 %s10, %s17
    %p71 = scmp.eq.s32.totalorder %s70, 0
    %s73 = sadd.s32 %s72, 1
    %s74 = scalar_select %p71, %s72, %s73
    %p77 = pneg %p71
    %p78 = scmp.eq.s32.totalorder %s10, 1
    %p79 = por %p77, %p78
    %p80 = scmp.ne.s32.totalorder %s72, %s75
    %p81 = scmp.eq.s32.totalorder %s10, 0
    %p82 = por %p80, %p81
    %p83 = scmp.ne.s32.totalorder %s72, %s75
    %p84 = scmp.eq.s32.totalorder %s15, 1
    %p85 = por %p83, %p84
    %p86 = scmp.ne.s32.totalorder %s75, %s76
    %p87 = scmp.eq.s32.totalorder %s15, 0
    %p88 = por %p86, %p87
    %p89 = scmp.ne.s32.totalorder %s75, %s76
    %p90 = scmp.eq.s32.totalorder %s16, 1
    %p91 = por %p89, %p90
    %p93 = scmp.ne.s32.totalorder %s76, %s92
    %p94 = scmp.eq.s32.totalorder %s16, 0
    %p95 = por %p93, %p94
    %s96 = ssub.s32 %s10, %s17
    %p97 = scmp.eq.s32.totalorder %s96, 0
    %s99 = sadd.s32 %s98, 1
    %s100 = scalar_select %p97, %s98, %s99
    %p103 = pneg %p97
    %p104 = scmp.eq.s32.totalorder %s10, 1
    %p105 = por %p103, %p104
    %p106 = scmp.ne.s32.totalorder %s98, %s101
    %p107 = scmp.eq.s32.totalorder %s10, 0
    %p108 = por %p106, %p107
    %p109 = scmp.ne.s32.totalorder %s98, %s101
    %p110 = scmp.eq.s32.totalorder %s15, 1
    %p111 = por %p109, %p110
    %p112 = scmp.ne.s32.totalorder %s101, %s102
    %p113 = scmp.eq.s32.totalorder %s15, 0
    %p114 = por %p112, %p113
    %p115 = scmp.ne.s32.totalorder %s101, %s102
    %p116 = scmp.eq.s32.totalorder %s16, 1
    %p117 = por %p115, %p116
    %p119 = scmp.ne.s32.totalorder %s102, %s118
    %p120 = scmp.eq.s32.totalorder %s16, 0
    %p121 = por %p119, %p120
    %s122 = ssub.s32 %s10, %s17
    %p123 = scmp.eq.s32.totalorder %s122, 0
    %s125 = sadd.s32 %s124, 1
    %s126 = scalar_select %p123, %s124, %s125
    %p129 = pneg %p123
    %p130 = scmp.eq.s32.totalorder %s10, 1
    %p131 = por %p129, %p130
    %p132 = scmp.ne.s32.totalorder %s124, %s127
    %p133 = scmp.eq.s32.totalorder %s10, 0
    %p134 = por %p132, %p133
    %p135 = scmp.ne.s32.totalorder %s124, %s127
    %p136 = scmp.eq.s32.totalorder %s15, 1
    %p137 = por %p135, %p136
    %p138 = scmp.ne.s32.totalorder %s127, %s128
    %p139 = scmp.eq.s32.totalorder %s15, 0
    %p140 = por %p138, %p139
    %p141 = scmp.ne.s32.totalorder %s127, %s128
    %p142 = scmp.eq.s32.totalorder %s16, 1
    %p143 = por %p141, %p142
    %p145 = scmp.ne.s32.totalorder %s128, %s144
    %p146 = scmp.eq.s32.totalorder %s16, 0
    %p147 = por %p145, %p146
    %p148 = scmp.le.s32.totalorder 1, %s10
    %p149 = scmp.lt.s32.totalorder %s10, 3
    %p150 = pnand %p148, %p149
    %p151 = pneg %p150
    // Predicated region
    $region9: #{tpu_custom_call.1} parent=5 // pred_check
      _
    $region10: #{tpu_custom_call.1} parent=5 // pred_check_branch
      %153 = sbr.rel (%p150) target = $region12
    $region11: #{tpu_custom_call.1} parent=5 // pred_region
      %s154 = ssub.s32 %s10, 1
    $region12: #{tpu_custom_call.1} parent=5 // pred_fallthru
      _
    %p155 = scmp.lt.s32.totalorder %s10, 2
    // Predicated region
    $region13: #{tpu_custom_call.1} parent=5 // pred_check
      %p156 = pneg %p155
    $region14: #{tpu_custom_call.1} parent=5 // pred_check_branch
      %158 = sbr.rel (%p156) target = $region16
    $region15: #{tpu_custom_call.1} parent=5 // pred_region
      // Predicated region
      $region17: #{tpu_custom_call.1} parent=15 // pred_check
        %p159 = pneg %p30
      $region18: #{tpu_custom_call.1} parent=15 // pred_check_branch
        %161 = sbr.rel (%p159) target = $region20
      $region19: #{tpu_custom_call.1} parent=15 // pred_region
        %p162 = scmp.lt.s32.totalorder %s10, 1
        %s163 = scalar_select %p162, %s10, 1
        %s164 = smul.addr %s163, 8
        %s165 = scalar_lea.vmem %s0, %s164
      $region20: #{tpu_custom_call.1} parent=15 // pred_fallthru
        _
      // Predicated region
      $region21: #{tpu_custom_call.1} parent=15 // pred_check
        %p166 = pneg %p56
      $region22: #{tpu_custom_call.1} parent=15 // pred_check_branch
        %168 = sbr.rel (%p166) target = $region24
      $region23: #{tpu_custom_call.1} parent=15 // pred_region
        %p169 = scmp.lt.s32.totalorder %s10, 1
        %s170 = scalar_select %p169, %s10, 1
        %s171 = smul.addr %s170, 8
        %s172 = scalar_lea.vmem %s1, %s171
      $region24: #{tpu_custom_call.1} parent=15 // pred_fallthru
        _
      // Predicated region
      $region25: #{tpu_custom_call.1} parent=15 // pred_check
        %p173 = pneg %p82
      $region26: #{tpu_custom_call.1} parent=15 // pred_check_branch
        %175 = sbr.rel (%p173) target = $region28
      $region27: #{tpu_custom_call.1} parent=15 // pred_region
        %p176 = scmp.lt.s32.totalorder %s10, 1
        %s177 = scalar_select %p176, %s10, 1
        %s178 = smul.addr %s177, 8
        %s179 = scalar_lea.vmem %s2, %s178
      $region28: #{tpu_custom_call.1} parent=15 // pred_fallthru
        _
      // Predicated region
      $region29: #{tpu_custom_call.1} parent=15 // pred_check
        %p180 = pneg %p108
      $region30: #{tpu_custom_call.1} parent=15 // pred_check_branch
        %182 = sbr.rel (%p180) target = $region32
      $region31: #{tpu_custom_call.1} parent=15 // pred_region
        %p183 = scmp.lt.s32.totalorder %s10, 1
        %s184 = scalar_select %p183, %s10, 1
        %s185 = smul.addr %s184, 8
        %s186 = scalar_lea.vmem %s3, %s185
      $region32: #{tpu_custom_call.1} parent=15 // pred_fallthru
        _
    $region16: #{tpu_custom_call.1} parent=5 // pred_fallthru
      _
    %p187 = scmp.le.s32.totalorder 1, %s10
    %p188 = scmp.lt.s32.totalorder %s10, 3
    %p189 = pnand %p187, %p188
    %p190 = pneg %p189
    // Predicated region
    $region33: #{tpu_custom_call.1} parent=5 // pred_check
      _
    $region34: #{tpu_custom_call.1} parent=5 // pred_check_branch
      %192 = sbr.rel (%p189) target = $region36
    $region35: #{tpu_custom_call.1} parent=5 // pred_region
      %s193 = ssub.s32 %s10, 1
      %p194 = scmp.lt.s32.totalorder %s15, 1
      %s195 = scalar_select %p194, %s15, 1
      %s196 = smul.addr %s195, 8
      %s197 = scalar_lea.vmem %s0, %s196
      %p198 = pneg %p36
      %p199 = pneg %p33
      %p200 = scmp.lt.s32.totalorder %s15, 1
      %s201 = scalar_select %p200, %s15, 1
      %s202 = smul.addr %s201, 8
      %s203 = scalar_lea.vmem %s1, %s202
      %p204 = pneg %p62
      %p205 = pneg %p59
      %p206 = scmp.lt.s32.totalorder %s15, 1
      %s207 = scalar_select %p206, %s15, 1
      %s208 = smul.addr %s207, 8
      %s209 = scalar_lea.vmem %s2, %s208
      %p210 = pneg %p88
      %p211 = pneg %p85
      %p212 = scmp.lt.s32.totalorder %s15, 1
      %s213 = scalar_select %p212, %s15, 1
      %s214 = smul.addr %s213, 8
      %s215 = scalar_lea.vmem %s3, %s214
      %p216 = pneg %p114
      %p217 = pneg %p111
      %p218 = pneg %p140
      %p219 = pneg %p137
      %p220 = scmp.lt.s32.totalorder %s15, 1
      %s221 = scalar_select %p220, %s15, 1
      %s222 = smul.addr %s221, 8
      %s223 = scalar_lea.vmem %s4, %s222
      %p224 = scmp.lt.s32.totalorder %s15, 1
      %s225 = scalar_select %p224, %s15, 1
      %s226 = smul.addr %s225, 8
      %s227 = scalar_lea.vmem %s0, %s226
      %p228 = scmp.lt.s32.totalorder %s15, 1
      %s229 = scalar_select %p228, %s15, 1
      %s230 = smul.addr %s229, 8
      %s231 = scalar_lea.vmem %s1, %s230
      %p232 = scmp.lt.s32.totalorder %s15, 1
      %s233 = scalar_select %p232, %s15, 1
      %s234 = smul.addr %s233, 8
      %s235 = scalar_lea.vmem %s2, %s234
      %p236 = scmp.lt.s32.totalorder %s15, 1
      %s237 = scalar_select %p236, %s15, 1
      %s238 = smul.addr %s237, 8
      %s239 = scalar_lea.vmem %s3, %s238
      %p240 = scmp.lt.s32.totalorder %s15, 1
      %s241 = scalar_select %p240, %s15, 1
      %s242 = smul.addr %s241, 8
      %s243 = scalar_lea.vmem %s4, %s242
      %v244 = vld [vmem:[%s227] sm:$0xff]
      %v245 = vld [vmem:[%s231] sm:$0xff]
      %v246 = vsub.f32 1.0, %v245
      %v247 = vxor.u32 %v244, 2147483648
      %v248 = vmul.f32 %v247, 1.442695
      %v249 = vpow.pop %v248
      %v250 = vadd.f32 %v249, 1.0
      %v251 = vrcp.pop %v250
      %v252 = vmul.f32 1.0, %v251
      %v253 = vsub.f32 1.0, %v252
      %v254 = vadd.f32 %v253, 0.05
      %v255 = vmin.f32 %v254, 1.0
      %v256 = vmul.f32 %v245, -0.8
      %v257 = vmax.f32 %v252, 1e-08
      %v258 = vlog2.pop %v257
      %v259 = vmul.f32 %v258, 0.6931472
      %v260 = vmul.f32 %v256, %v259
      %v261 = vmul.f32 %v246, 0.2
      %v262 = vmax.f32 %v255, 1e-08
      %v263 = vlog2.pop %v262
      %v264 = vmul.f32 %v263, 0.6931472
      %v265 = vmul.f32 %v261, %v264
      %v266 = vsub.f32 %v260, %v265
      %v267 = vmul.f32 %v255, %v245
      %v268 = vmul.f32 %v252, %v246
      %v269 = vadd.f32 %v267, %v268
      %v270 = vmul.f32 %v245, 0.0
      %v271 = vadd.f32 %v270, %v246
      %v272 = vmax.f32 %v269, 1e-08
      %v273 = vpow.f32 %v272, %v271
      %v274 = vmul.f32 %v266, %v273
      %v275 = vld [vmem:[%s235] sm:$0xff]
      %v276 = vmul.f32 %v274, %v275
      %v277 = vld [vmem:[%s239] sm:$0xff]
      %279 = vset.pattern.permute.xlu0 0
      %280 = vperm.xlu0 %279, %v277
      %v281 = vpop.permute.xlu0 %280
      %v283 = vmul.f32 %v276, %v281
      %v284 = vadd.f32 %v283, 0.0
      %vm285 = vcmask 64512
      %286 = vst.msk [vmem:[%s243] sm:$0xff] %vm285, %v284
      %p287 = scmp.lt.s32.totalorder %s15, 1
      %s288 = scalar_select %p287, %s15, 1
      %s289 = smul.addr %s288, 8
      %s290 = scalar_lea.vmem %s4, %s289
      // Predicated region
      $region37: #{tpu_custom_call.1} parent=35 // pred_check
        %p291 = pneg %p137
      $region38: #{tpu_custom_call.1} parent=35 // pred_check_branch
        %293 = sbr.rel (%p291) target = $region40
      $region39: #{tpu_custom_call.1} parent=35 // pred_region
        _
      $region40: #{tpu_custom_call.1} parent=35 // pred_fallthru
        _
    $region36: #{tpu_custom_call.1} parent=5 // pred_fallthru
      _
    %p294 = scmp.le.s32.totalorder 2, %s10
    // Predicated region
    $region41: #{tpu_custom_call.1} parent=5 // pred_check
      %p295 = pneg %p294
    $region42: #{tpu_custom_call.1} parent=5 // pred_check_branch
      %297 = sbr.rel (%p295) target = $region44
    $region43: #{tpu_custom_call.1} parent=5 // pred_region
      %s298 = ssub.s32 %s10, 2
      // Predicated region
      $region45: #{tpu_custom_call.1} parent=43 // pred_check
        %p299 = pneg %p143
      $region46: #{tpu_custom_call.1} parent=43 // pred_check_branch
        %301 = sbr.rel (%p299) target = $region48
      $region47: #{tpu_custom_call.1} parent=43 // pred_region
        %p302 = scmp.lt.s32.totalorder %s16, 1
        %s303 = scalar_select %p302, %s16, 1
        %s304 = smul.addr %s303, 8
        %s305 = scalar_lea.vmem %s4, %s304
      $region48: #{tpu_custom_call.1} parent=43 // pred_fallthru
        _
    $region44: #{tpu_custom_call.1} parent=5 // pred_fallthru
      _
  $region6: #{tpu_custom_call.1} parent=0 // loop_footer
    %s14 = sadd.s32 1, %s10
  $region7: #{tpu_custom_call.1} parent=0 // loop_footer_branch
    %9 = sbr.rel target = $region3
  $region8: #{tpu_custom_call.1} parent=0 // loop_exit
    _

</llo_original>
